<compile_context>
chip_gen: v7x
topology: tpu7x:2x2x1
jax: 0.10.0
libtpu: 0.0.40
codegen_flags: <defaults>
</compile_context>

<pallas_src>
import functools

import jax
import jax.numpy as jnp
from jax.experimental import pallas as pl
from jax.experimental.pallas import tpu as pltpu


def _pow_spec(d, p_norm):
    """(|d|)^p with the power specialized statically (d may be negative)."""
    if p_norm == 2:
        return d * d                      # even power: the abs is redundant
    if p_norm == 1:
        return jnp.abs(d)
    if isinstance(p_norm, int) and p_norm > 0:
        base = d if p_norm % 2 == 0 else jnp.abs(d)
        return jax.lax.integer_pow(base, p_norm)
    return jnp.abs(d) ** p_norm           # generic fallback


def _gdl_kernel(pred_ref, gt_ref, out_ref, *, H, p_norm):
    # pred_ref / gt_ref : (Nb, C, Ht, W) block, (Ht, W) on (sublane, lane).
    nb, _, ht, w = pred_ref.shape
    p = jnp.sum(pred_ref[...].astype(jnp.float32), axis=1)   # (Nb, Ht, W) channel sum
    g = jnp.sum(gt_ref[...].astype(jnp.float32), axis=1)

    r = nb * ht                                # fold batch into sublanes (free:
    p2 = p.reshape(r, w)                       # ht is a multiple of 8 or nb == 1)
    g2 = g.reshape(r, w)

    # Neighbour values via XLU rotates (no relayout copies from by-1 slices).
    p_xn = pltpu.roll(p2, shift=1, axis=1)
    g_xn = pltpu.roll(g2, shift=1, axis=1)
    p_yn = pltpu.roll(p2, shift=1, axis=0)
    g_yn = pltpu.roll(g2, shift=1, axis=0)

    # In-kernel masks from iota (no mask DMA streams).  The pair-validity masks
    # apply the SAME rotation to the index grids, so they select exactly the
    # |row/col delta| == 1 pairs whatever wrap convention the rotate uses;
    # lane wrap-around and cross-image sublane wraps have |delta| >= 2.
    col = jax.lax.broadcasted_iota(jnp.int32, (nb, ht, w), 2).reshape(r, w)
    lrow = jax.lax.broadcasted_iota(jnp.int32, (nb, ht, w), 1).reshape(r, w)
    col_n = pltpu.roll(col, shift=1, axis=1)
    lrow_n = pltpu.roll(lrow, shift=1, axis=0)
    wx = (jnp.abs(col_n - col) == 1).astype(jnp.float32)
    wy = (jnp.abs(lrow_n - lrow) == 1).astype(jnp.float32)

    grow = lrow + pl.program_id(1) * ht        # global image row of each element
    wb = ((col == 0).astype(jnp.float32) + (col == w - 1).astype(jnp.float32)
          + (grow == 0).astype(jnp.float32) + (grow == H - 1).astype(jnp.float32))

    fx = _pow_spec(jnp.abs(g_xn - g2) - jnp.abs(p_xn - p2), p_norm)
    fy = _pow_spec(jnp.abs(g_yn - g2) - jnp.abs(p_yn - p2), p_norm)
    fb = _pow_spec(jnp.abs(g2) - jnp.abs(p2), p_norm)   # zero-padding boundary terms

    total = fx * wx + fy * wy + fb * wb        # fused -> single reduction per step
    loss = jnp.sum(total)
    out_ref[...] = jnp.full(out_ref.shape, loss, jnp.float32)   # lane-dense partial


def _choose_tiling(N, C, H, W, itemsize, budget_bytes):
    """Pick (Nb, Ht): largest block within the VMEM budget, >= 2 grid steps if possible."""
    w_pad = -(-W // 128) * 128
    sub_mult = {4: 8, 2: 16, 1: 32}.get(itemsize, 8)

    def cost(nb, ht):
        ht_pad = -(-ht // 8) * 8
        tile = ht_pad * w_pad
        in_bytes = 2 * 2 * nb * C * tile * itemsize      # pred+gt, double-buffered
        tmp_bytes = 12 * nb * tile * 4                   # f32 in-kernel temporaries
        return in_bytes + tmp_bytes

    ht_cands = [d for d in range(H, 0, -1)
                if H % d == 0 and (d % sub_mult == 0 or d == H)]
    if H % 8 == 0:
        n_divs = [d for d in range(N, 0, -1) if N % d == 0]
    else:
        n_divs = [1]     # keep the in-kernel (Nb*Ht, W) reshape a pure squeeze
    # TODO(synk): relax the Nb-divides-N constraint (ragged last batch block) for
    # awkward N with tiny images; H-tiling already keeps blocks large otherwise.

    choice = None
    for ht in ht_cands:
        for nb in n_divs:
            if cost(nb, ht) <= budget_bytes:
                choice = (nb, ht)
                break
        if choice is not None:
            break
    if choice is None:
        # TODO(synk): also tile W for extremely wide images; rely on vmem_limit here.
        choice = (1, ht_cands[-1])
    nb, ht = choice

    # Keep >= 2 grid steps so both v7x TensorCores (megacore) get work.
    if (N // nb) * (H // ht) < 2:
        smaller_nb = [d for d in n_divs if d < nb]
        smaller_ht = [d for d in ht_cands if d < ht]
        if smaller_nb:
            nb = smaller_nb[0]
        elif smaller_ht:
            ht = smaller_ht[0]
    return nb, ht


def gdl_ref(pred, gt, p_norm=2):
    """Pure-JAX reference replicating the PyTorch conv semantics exactly."""
    N, C, H, W = pred.shape

    def dx(x):  # convX with weight [-1, 1] per channel, padding (0, 1)
        s = jnp.sum(x, axis=1)                       # single output channel
        sp = jnp.pad(s, ((0, 0), (0, 0), (1, 1)))
        return sp[:, :, 1:] - sp[:, :, :-1]          # (N, H, W+1)

    def dy(x):  # convY with weight [1, -1] per channel, padding (1, 0)
        s = jnp.sum(x, axis=1)
        sp = jnp.pad(s, ((0, 0), (1, 1), (0, 0)))
        return sp[:, :-1, :] - sp[:, 1:, :]          # (N, H+1, W)

    gdx, pdx = jnp.abs(dx(gt)), jnp.abs(dx(pred))
    gdy, pdy = jnp.abs(dy(gt)), jnp.abs(dy(pred))
    lx = jnp.sum(jnp.abs(gdx - pdx) ** p_norm)
    ly = jnp.sum(jnp.abs(gdy - pdy) ** p_norm)
    return (lx + ly) / (N * C * H * W)


def gdl_loss(pred, gt, p_norm=2, *, vmem_budget_bytes=None):
    """Forward pass of the GDL module (mean gradient-difference loss)."""
    assert pred.ndim == 4 and gt.ndim == 4
    assert pred.shape == gt.shape, f"{pred.shape} vs {gt.shape}"
    N, C, H, W = pred.shape
    inv_denom = 1.0 / float(N * C * H * W)

    if H < 3 or W < 3:
        # TODO(synk): degenerate spatial sizes (the in-kernel pair masks need >= 3
        # rows/cols); use the plain-JAX formulation for these pathological inputs.
        return gdl_ref(pred.astype(jnp.float32), gt.astype(jnp.float32), p_norm)

    itemsize = jnp.dtype(pred.dtype).itemsize

    # Per-generation VMEM sizing (v5e/v6e: 128 MiB, v7x: 64 MiB per TensorCore).
    try:
        vmem_cap = int(pltpu.get_tpu_info().vmem_capacity_bytes)
    except Exception:
        vmem_cap = 64 * 1024 * 1024       # conservative fallback
    budget = int(0.35 * vmem_cap) if vmem_budget_bytes is None else int(vmem_budget_bytes)
    vmem_limit = int(0.75 * vmem_cap)

    Nb, Ht = _choose_tiling(N, C, H, W, itemsize, budget)
    Gn, Gh = N // Nb, H // Ht

    kernel = functools.partial(_gdl_kernel, H=H, p_norm=p_norm)
    cost = pl.CostEstimate(
        flops=int(N * H * W * (2 * (C - 1) + 24)),
        transcendentals=0,
        bytes_accessed=int(2 * N * C * H * W * itemsize + Gn * Gh * 128 * 4),
    )
    partials = pl.pallas_call(
        kernel,
        out_shape=jax.ShapeDtypeStruct((Gn, Gh, 1, 128), jnp.float32),
        grid_spec=pltpu.PrefetchScalarGridSpec(
            num_scalar_prefetch=0,
            grid=(Gn, Gh),
            in_specs=[
                pl.BlockSpec((Nb, C, Ht, W), lambda bn, bh: (bn, 0, bh, 0)),  # pred
                pl.BlockSpec((Nb, C, Ht, W), lambda bn, bh: (bn, 0, bh, 0)),  # gt
            ],
            out_specs=pl.BlockSpec((1, 1, 1, 128), lambda bn, bh: (bn, bh, 0, 0)),
        ),
        compiler_params=pltpu.CompilerParams(
            dimension_semantics=("parallel", "parallel"),   # independent partials
            vmem_limit_bytes=vmem_limit,
        ),
        cost_estimate=cost,
    )(pred, gt)

    loss = jnp.sum(partials[:, :, 0, 0])

    if Gh > 1:
        # Cross-tile y-pairs (rows k*Ht-1 / k*Ht): Gh-1 row pairs per image, a tiny
        # strided read handled in plain JAX.
        gt_t = jnp.sum(gt[:, :, Ht - 1:H - 1:Ht, :].astype(jnp.float32), axis=1)
        gt_b = jnp.sum(gt[:, :, Ht:H:Ht, :].astype(jnp.float32), axis=1)
        pr_t = jnp.sum(pred[:, :, Ht - 1:H - 1:Ht, :].astype(jnp.float32), axis=1)
        pr_b = jnp.sum(pred[:, :, Ht:H:Ht, :].astype(jnp.float32), axis=1)
        loss = loss + jnp.sum(
            _pow_spec(jnp.abs(gt_t - gt_b) - jnp.abs(pr_t - pr_b), p_norm))

    # TODO(synk): for W < 128 a lane-packing specialization (fold several rows into
    # the lane axis) would raise vreg occupancy for tiny images; not needed here.
    return loss * inv_denom


if __name__ == "__main__":
    key = jax.random.PRNGKey(0)
    k1, k2, k3, k4 = jax.random.split(key, 4)

    # Case 1: small f32 images (C=3 is fixed by the module's conv filters).
    N, C, H, W = 2, 3, 16, 16
    pred = jax.random.normal(k1, (N, C, H, W), dtype=jnp.float32)
    gt = jax.random.normal(k2, (N, C, H, W), dtype=jnp.float32)
    out = jax.block_until_ready(gdl_loss(pred, gt))
    ref = gdl_ref(pred, gt)
    assert jnp.allclose(out, ref, rtol=1e-4, atol=1e-6), (out, ref)

    # pNorm = 1 path.
    out1 = jax.block_until_ready(gdl_loss(pred, gt, p_norm=1))
    ref1 = gdl_ref(pred, gt, p_norm=1)
    assert jnp.allclose(out1, ref1, rtol=1e-4, atol=1e-6), (out1, ref1)

    # Case 2: odd batch + forced H-tiling (tiny VMEM budget -> Ht < H), exercising
    # the cross-tile seam terms and the multi-step grid.
    N2, C2, H2, W2 = 3, 3, 32, 16
    pred2 = jax.random.normal(k3, (N2, C2, H2, W2), dtype=jnp.float32)
    gt2 = jax.random.normal(k4, (N2, C2, H2, W2), dtype=jnp.float32)
    out2 = jax.block_until_ready(gdl_loss(pred2, gt2, vmem_budget_bytes=128 * 1024))
    ref2 = gdl_ref(pred2, gt2)
    assert jnp.allclose(out2, ref2, rtol=1e-4, atol=1e-6), (out2, ref2)

    # Case 3: bf16 inputs (kernel upcasts; halves HBM traffic on real workloads).
    pred_bf = pred.astype(jnp.bfloat16)
    gt_bf = gt.astype(jnp.bfloat16)
    out3 = jax.block_until_ready(gdl_loss(pred_bf, gt_bf))
    ref3 = gdl_ref(pred_bf.astype(jnp.float32), gt_bf.astype(jnp.float32))
    assert jnp.allclose(out3, ref3, rtol=1e-4, atol=1e-6), (out3, ref3)

    print("KERNEL_OK")
</pallas_src>

<mosaic_0001>
module attributes {stable_mosaic.version = 11 : i64} {
  func.func @_gdl_kernel(%arg0: i32, %arg1: i32, %arg2: memref<1x3x16x16xf32, #tpu.memory_space<vmem>>, %arg3: memref<1x3x16x16xf32, #tpu.memory_space<vmem>>, %arg4: memref<1x1x1x128xf32, #tpu.memory_space<vmem>>) attributes {dimension_semantics = [#tpu.dimension_semantics<parallel>, #tpu.dimension_semantics<parallel>], iteration_bounds = array<i64: 2, 1>, scalar_prefetch = 0 : i64, scratch_operands = 0 : i64, tpu.core_type = #tpu.core_type<tc>, window_params = [{transform_indices = @transform_0, window_bounds = array<i64: 1, 3, 16, 16>}, {transform_indices = @transform_1, window_bounds = array<i64: 1, 3, 16, 16>}, {transform_indices = @transform_2, window_bounds = array<i64: 1, 1, 1, 128>}]} {
    %c0 = arith.constant 0 : index
    %c0_0 = arith.constant 0 : index
    %c0_1 = arith.constant 0 : index
    %c0_2 = arith.constant 0 : index
    %0 = vector.load %arg2[%c0, %c0_0, %c0_1, %c0_2] : memref<1x3x16x16xf32, #tpu.memory_space<vmem>>, vector<1x3x16x16xf32>
    %cst = arith.constant dense<0.000000e+00> : vector<1x16x16xf32>
    %1 = vector.multi_reduction <add>, %0, %cst [1] : vector<1x3x16x16xf32> to vector<1x16x16xf32>
    %c0_3 = arith.constant 0 : index
    %c0_4 = arith.constant 0 : index
    %c0_5 = arith.constant 0 : index
    %c0_6 = arith.constant 0 : index
    %2 = vector.load %arg3[%c0_3, %c0_4, %c0_5, %c0_6] : memref<1x3x16x16xf32, #tpu.memory_space<vmem>>, vector<1x3x16x16xf32>
    %cst_7 = arith.constant dense<0.000000e+00> : vector<1x16x16xf32>
    %3 = vector.multi_reduction <add>, %2, %cst_7 [1] : vector<1x3x16x16xf32> to vector<1x16x16xf32>
    %4 = vector.shape_cast %1 : vector<1x16x16xf32> to vector<16x16xf32>
    %5 = vector.shape_cast %3 : vector<1x16x16xf32> to vector<16x16xf32>
    %c1_i32 = arith.constant 1 : i32
    %6 = tpu.dynamic_rotate %4 by %c1_i32 dim 1 : vector<16x16xf32>, i32 -> vector<16x16xf32>
    %c1_i32_8 = arith.constant 1 : i32
    %7 = tpu.dynamic_rotate %5 by %c1_i32_8 dim 1 : vector<16x16xf32>, i32 -> vector<16x16xf32>
    %c1_i32_9 = arith.constant 1 : i32
    %8 = tpu.dynamic_rotate %4 by %c1_i32_9 dim 0 : vector<16x16xf32>, i32 -> vector<16x16xf32>
    %c1_i32_10 = arith.constant 1 : i32
    %9 = tpu.dynamic_rotate %5 by %c1_i32_10 dim 0 : vector<16x16xf32>, i32 -> vector<16x16xf32>
    %10 = tpu.iota {dimensions = array<i32: 2>} : vector<1x16x16xi32>
    %11 = vector.shape_cast %10 : vector<1x16x16xi32> to vector<16x16xi32>
    %12 = tpu.iota {dimensions = array<i32: 1>} : vector<1x16x16xi32>
    %13 = vector.shape_cast %12 : vector<1x16x16xi32> to vector<16x16xi32>
    %c1_i32_11 = arith.constant 1 : i32
    %14 = tpu.dynamic_rotate %11 by %c1_i32_11 dim 1 : vector<16x16xi32>, i32 -> vector<16x16xi32>
    %c1_i32_12 = arith.constant 1 : i32
    %15 = tpu.dynamic_rotate %13 by %c1_i32_12 dim 0 : vector<16x16xi32>, i32 -> vector<16x16xi32>
    %16 = arith.subi %14, %11 : vector<16x16xi32>
    %17 = math.absi %16 : vector<16x16xi32>
    %c1_i32_13 = arith.constant 1 : i32
    %18 = vector.broadcast %c1_i32_13 : i32 to vector<16x16xi32>
    %19 = arith.cmpi eq, %17, %18 : vector<16x16xi32>
    %20 = arith.extui %19 : vector<16x16xi1> to vector<16x16xi32>
    %21 = arith.sitofp %20 : vector<16x16xi32> to vector<16x16xf32>
    %22 = arith.subi %15, %13 : vector<16x16xi32>
    %23 = math.absi %22 : vector<16x16xi32>
    %c1_i32_14 = arith.constant 1 : i32
    %24 = vector.broadcast %c1_i32_14 : i32 to vector<16x16xi32>
    %25 = arith.cmpi eq, %23, %24 : vector<16x16xi32>
    %26 = arith.extui %25 : vector<16x16xi1> to vector<16x16xi32>
    %27 = arith.sitofp %26 : vector<16x16xi32> to vector<16x16xf32>
    %c16_i32 = arith.constant 16 : i32
    %28 = arith.muli %arg1, %c16_i32 : i32
    %29 = vector.broadcast %28 : i32 to vector<16x16xi32>
    %30 = arith.addi %13, %29 : vector<16x16xi32>
    %c0_i32 = arith.constant 0 : i32
    %31 = vector.broadcast %c0_i32 : i32 to vector<16x16xi32>
    %32 = arith.cmpi eq, %11, %31 : vector<16x16xi32>
    %33 = arith.extui %32 : vector<16x16xi1> to vector<16x16xi32>
    %34 = arith.sitofp %33 : vector<16x16xi32> to vector<16x16xf32>
    %c15_i32 = arith.constant 15 : i32
    %35 = vector.broadcast %c15_i32 : i32 to vector<16x16xi32>
    %36 = arith.cmpi eq, %11, %35 : vector<16x16xi32>
    %37 = arith.extui %36 : vector<16x16xi1> to vector<16x16xi32>
    %38 = arith.sitofp %37 : vector<16x16xi32> to vector<16x16xf32>
    %39 = arith.addf %34, %38 : vector<16x16xf32>
    %c0_i32_15 = arith.constant 0 : i32
    %40 = vector.broadcast %c0_i32_15 : i32 to vector<16x16xi32>
    %41 = arith.cmpi eq, %30, %40 : vector<16x16xi32>
    %42 = arith.extui %41 : vector<16x16xi1> to vector<16x16xi32>
    %43 = arith.sitofp %42 : vector<16x16xi32> to vector<16x16xf32>
    %44 = arith.addf %39, %43 : vector<16x16xf32>
    %c15_i32_16 = arith.constant 15 : i32
    %45 = vector.broadcast %c15_i32_16 : i32 to vector<16x16xi32>
    %46 = arith.cmpi eq, %30, %45 : vector<16x16xi32>
    %47 = arith.extui %46 : vector<16x16xi1> to vector<16x16xi32>
    %48 = arith.sitofp %47 : vector<16x16xi32> to vector<16x16xf32>
    %49 = arith.addf %44, %48 : vector<16x16xf32>
    %50 = arith.subf %7, %5 : vector<16x16xf32>
    %51 = math.absf %50 : vector<16x16xf32>
    %52 = arith.subf %6, %4 : vector<16x16xf32>
    %53 = math.absf %52 : vector<16x16xf32>
    %54 = arith.subf %51, %53 : vector<16x16xf32>
    %55 = arith.mulf %54, %54 : vector<16x16xf32>
    %56 = arith.subf %9, %5 : vector<16x16xf32>
    %57 = math.absf %56 : vector<16x16xf32>
    %58 = arith.subf %8, %4 : vector<16x16xf32>
    %59 = math.absf %58 : vector<16x16xf32>
    %60 = arith.subf %57, %59 : vector<16x16xf32>
    %61 = arith.mulf %60, %60 : vector<16x16xf32>
    %62 = math.absf %5 : vector<16x16xf32>
    %63 = math.absf %4 : vector<16x16xf32>
    %64 = arith.subf %62, %63 : vector<16x16xf32>
    %65 = arith.mulf %64, %64 : vector<16x16xf32>
    %66 = arith.mulf %55, %21 : vector<16x16xf32>
    %67 = arith.mulf %61, %27 : vector<16x16xf32>
    %68 = arith.addf %66, %67 : vector<16x16xf32>
    %69 = arith.mulf %65, %49 : vector<16x16xf32>
    %70 = arith.addf %68, %69 : vector<16x16xf32>
    %71 = vector.shape_cast %70 : vector<16x16xf32> to vector<1x16x16xf32>
    %cst_17 = arith.constant dense<0.000000e+00> : vector<1xf32>
    %72 = vector.multi_reduction <add>, %71, %cst_17 [1, 2] : vector<1x16x16xf32> to vector<1xf32>
    %73 = vector.shape_cast %72 : vector<1xf32> to vector<1x1x1xf32>
    %74 = vector.extract %73[0, 0, 0] : f32 from vector<1x1x1xf32>
    %75 = vector.broadcast %74 : f32 to vector<1x1x1x128xf32>
    %c0_18 = arith.constant 0 : index
    %c0_19 = arith.constant 0 : index
    %c0_20 = arith.constant 0 : index
    %c0_21 = arith.constant 0 : index
    %76 = vector.load %arg4[%c0_18, %c0_19, %c0_20, %c0_21] : memref<1x1x1x128xf32, #tpu.memory_space<vmem>>, vector<1x1x1x128xf32>
    tpu.vector_store %arg4[%c0_18, %c0_19, %c0_20, %c0_21], %75 {strides = array<i32>} : memref<1x1x1x128xf32, #tpu.memory_space<vmem>>, vector<1x1x1x128xf32>,
    return
  }
  func.func @transform_0(%arg0: i32, %arg1: i32) -> (i32, i32, i32, i32) {
    %c0_i32 = arith.constant 0 : i32
    %c0_i32_0 = arith.constant 0 : i32
    %c0_i32_1 = arith.constant 0 : i32
    return %arg0, %c0_i32, %arg1, %c0_i32_0 : i32, i32, i32, i32
  }
  func.func @transform_1(%arg0: i32, %arg1: i32) -> (i32, i32, i32, i32) {
    %c0_i32 = arith.constant 0 : i32
    %c0_i32_0 = arith.constant 0 : i32
    %c0_i32_1 = arith.constant 0 : i32
    return %arg0, %c0_i32, %arg1, %c0_i32_0 : i32, i32, i32, i32
  }
  func.func @transform_2(%arg0: i32, %arg1: i32) -> (i32, i32, i32, i32) {
    %c0_i32 = arith.constant 0 : i32
    %c0_i32_0 = arith.constant 0 : i32
    %c0_i32_1 = arith.constant 0 : i32
    return %arg0, %arg1, %c0_i32, %c0_i32_0 : i32, i32, i32, i32
  }
}

</mosaic_0001>

<llo_original>
// kernel: tpu_custom_call.1
$region0: #{tpu_custom_call.1}
  #allocation0 [shape = 'u32[]', space=smem, size = 0x4, offset = 0x4, fixed_abs, tag = 'smem constant byte address 0x4 - core index']
  #allocation1 [shape = 'u32[144,128]{1,0:T(1,128)}', space=vmem, size = 0x12000, scoped, tag = 'internal scratch']
  %s0 = inlined_call_operand.hbm [shape: f32[2,3,16,16], index: 0, kind: input, shape index: {}]
  %s1 = inlined_call_operand.hbm [shape: f32[2,3,16,16], index: 1, kind: input, shape index: {}]
  %s2 = inlined_call_operand.hbm [shape: f32[2,1,1,128], index: 2, kind: output, shape index: {}]
  %s3 = sld [smem:[#allocation0]]
  $region49: #{tpu_custom_call.1} parent=0
    _
  %s5 = ssub.s32 1, %s3
  %s6 = scalar_select 0, %s5, %s3
  $region1: #{tpu_custom_call.1} parent=0
    #allocation2 [shape = 'u8[49152]{0}', space=vmem, size = 0xc000, scoped, tag = 'input window, operand 0']
    #allocation3 [shape = 's32[2]{0}', space=sflag, size = 0x8, scoped, tag = 'scoped memory for tpu_custom_call.1']
    #allocation4 [shape = 's32[2]{0}', space=sflag, size = 0x8, scoped, tag = 'scoped memory for tpu_custom_call.1']
    #allocation5 [shape = 'u8[49152]{0}', space=vmem, size = 0xc000, scoped, tag = 'input window, operand 1']
    #allocation6 [shape = 's32[2]{0}', space=sflag, size = 0x8, scoped, tag = 'scoped memory for tpu_custom_call.1']
    #allocation7 [shape = 'u8[1024]{0}', space=vmem, size = 0x400, scoped, tag = 'output window, operand 0']
    %7 = vsyncpa [#allocation3], 0
    %s8 = scalar_lea.sflag [#allocation3], 1
    %9 = vsyncpa %s8, 0
    %10 = vsyncpa [#allocation6], 0
    %s11 = scalar_lea.sflag [#allocation6], 1
    %12 = vsyncpa %s11, 0
    %13 = vsyncpa [#allocation4], 0
    %s14 = scalar_lea.sflag [#allocation4], 1
    %15 = vsyncpa %s14, 0
    loop: start=0, step=1, limit=4
    $region2: #{tpu_custom_call.1} parent=1 // loop_pre_header
      _
    $region3: #{tpu_custom_call.1} parent=1 // loop_header
      %s17 = sphi 0, %s21
      %p18 = scmp.ge.s32.totalorder %s17, 4
      %s24 = sphi 0, %s36
      %s25 = sphi 0, %s32
      %s26 = sphi 0, %s24
      %s27 = sphi 0, %s25
      %s28 = sphi 0, %s26
      %s29 = sphi 0, %s27
      %s41 = sphi 0, %s43
      %s44 = sphi 0, %s41
      %s45 = sphi 0, %s44
      %s61 = sphi 0, %s45
      %s69 = sphi 0, %s71
      %s72 = sphi 0, %s69
      %s73 = sphi 0, %s72
      %s89 = sphi 0, %s73
      %s97 = sphi 0, %s99
      %s100 = sphi 0, %s97
      %s101 = sphi 0, %s100
      %s117 = sphi 0, %s101
    $region4: #{tpu_custom_call.1} parent=1 // loop_header_branch
      %20 = sbr.rel (%p18) target = $region8
    $region5: #{tpu_custom_call.1} parent=1 // loop_body
      %s22 = ssub.s32 %s17, 1
      %s23 = ssub.s32 %s17, 2
      %s30 = sadd.s32 1, %s25
      %p31 = scmp.ge.s32.totalorder %s30, 1
      %s32 = scalar_select %p31, 0, %s30
      %s33 = sadd.s32 1, %s24
      %s34 = scalar_select %p31, %s33, %s24
      %p35 = scmp.ge.s32.totalorder %s34, 2
      %s36 = scalar_select %p35, 0, %s34
      %s37 = ssub.s32 %s24, %s36
      %s38 = ssub.s32 %s25, %s32
      %s39 = sor.u32 %s37, %s38
      %p40 = scmp.eq.s32.totalorder %s39, 0
      %s42 = sadd.s32 %s41, 1
      %s43 = scalar_select %p40, %s41, %s42
      %p46 = pneg %p40
      %p47 = scmp.eq.s32.totalorder %s17, 1
      %p48 = por %p46, %p47
      %p49 = scmp.ne.s32.totalorder %s41, %s44
      %p50 = scmp.eq.s32.totalorder %s17, 0
      %p51 = por %p49, %p50
      %p52 = scmp.ne.s32.totalorder %s41, %s44
      %p53 = scmp.eq.s32.totalorder %s22, 1
      %p54 = por %p52, %p53
      %p55 = scmp.ne.s32.totalorder %s44, %s45
      %p56 = scmp.eq.s32.totalorder %s22, 0
      %p57 = por %p55, %p56
      %p58 = scmp.ne.s32.totalorder %s44, %s45
      %p59 = scmp.eq.s32.totalorder %s23, 1
      %p60 = por %p58, %p59
      %p62 = scmp.ne.s32.totalorder %s45, %s61
      %p63 = scmp.eq.s32.totalorder %s23, 0
      %p64 = por %p62, %p63
      %s65 = ssub.s32 %s24, %s36
      %s66 = ssub.s32 %s25, %s32
      %s67 = sor.u32 %s65, %s66
      %p68 = scmp.eq.s32.totalorder %s67, 0
      %s70 = sadd.s32 %s69, 1
      %s71 = scalar_select %p68, %s69, %s70
      %p74 = pneg %p68
      %p75 = scmp.eq.s32.totalorder %s17, 1
      %p76 = por %p74, %p75
      %p77 = scmp.ne.s32.totalorder %s69, %s72
      %p78 = scmp.eq.s32.totalorder %s17, 0
      %p79 = por %p77, %p78
      %p80 = scmp.ne.s32.totalorder %s69, %s72
      %p81 = scmp.eq.s32.totalorder %s22, 1
      %p82 = por %p80, %p81
      %p83 = scmp.ne.s32.totalorder %s72, %s73
      %p84 = scmp.eq.s32.totalorder %s22, 0
      %p85 = por %p83, %p84
      %p86 = scmp.ne.s32.totalorder %s72, %s73
      %p87 = scmp.eq.s32.totalorder %s23, 1
      %p88 = por %p86, %p87
      %p90 = scmp.ne.s32.totalorder %s73, %s89
      %p91 = scmp.eq.s32.totalorder %s23, 0
      %p92 = por %p90, %p91
      %s93 = ssub.s32 %s24, %s36
      %s94 = ssub.s32 %s25, %s32
      %s95 = sor.u32 %s93, %s94
      %p96 = scmp.eq.s32.totalorder %s95, 0
      %s98 = sadd.s32 %s97, 1
      %s99 = scalar_select %p96, %s97, %s98
      %p102 = pneg %p96
      %p103 = scmp.eq.s32.totalorder %s17, 1
      %p104 = por %p102, %p103
      %p105 = scmp.ne.s32.totalorder %s97, %s100
      %p106 = scmp.eq.s32.totalorder %s17, 0
      %p107 = por %p105, %p106
      %p108 = scmp.ne.s32.totalorder %s97, %s100
      %p109 = scmp.eq.s32.totalorder %s22, 1
      %p110 = por %p108, %p109
      %p111 = scmp.ne.s32.totalorder %s100, %s101
      %p112 = scmp.eq.s32.totalorder %s22, 0
      %p113 = por %p111, %p112
      %p114 = scmp.ne.s32.totalorder %s100, %s101
      %p115 = scmp.eq.s32.totalorder %s23, 1
      %p116 = por %p114, %p115
      %p118 = scmp.ne.s32.totalorder %s101, %s117
      %p119 = scmp.eq.s32.totalorder %s23, 0
      %p120 = por %p118, %p119
      %p121 = scmp.le.s32.totalorder 1, %s17
      %p122 = scmp.lt.s32.totalorder %s17, 3
      %p123 = pnand %p121, %p122
      %p124 = pneg %p123
      // Predicated region
      $region9: #{tpu_custom_call.1} parent=5 // pred_check
        _
      $region10: #{tpu_custom_call.1} parent=5 // pred_check_branch
        %126 = sbr.rel (%p123) target = $region12
      $region11: #{tpu_custom_call.1} parent=5 // pred_region
        %s127 = ssub.s32 %s17, 1
      $region12: #{tpu_custom_call.1} parent=5 // pred_fallthru
        _
      %p128 = scmp.lt.s32.totalorder %s17, 2
      // Predicated region
      $region13: #{tpu_custom_call.1} parent=5 // pred_check
        %p129 = pneg %p128
      $region14: #{tpu_custom_call.1} parent=5 // pred_check_branch
        %131 = sbr.rel (%p129) target = $region16
      $region15: #{tpu_custom_call.1} parent=5 // pred_region
        // Predicated region
        $region17: #{tpu_custom_call.1} parent=15 // pred_check
          %p132 = pneg %p51
        $region18: #{tpu_custom_call.1} parent=15 // pred_check_branch
          %134 = sbr.rel (%p132) target = $region20
        $region19: #{tpu_custom_call.1} parent=15 // pred_region
          %s135 = sand.u32 %s41, 1
          %s136 = scalar_lea.sflag [#allocation3], %s135
          %s137 = sand.u32 %s41, 1
          %s138 = smul.addr %s137, 48
          %s139 = scalar_lea.vmem [#allocation2], %s138
          %s140 = smul.u32 2, %s25
          %s142 = ssub.s32 768, 768
          %143 = vsyncadd %s136, %s142
          %s144 = smul.addr %s24, 6
          %s145 = sadd.s32 %s140, %s144
          %s146 = smul.addr %s145, 128
          %s147 = scalar_lea.hbm %s0, %s146
          %s148 = sshll.u32 %s139, 4
          %s149 = int_to_ptr.vmem [resolvable:$true] %s148
          %154 = dma.hbm_to_vmem [thread:$0]  %s147, 768, %s149, %s136, 128, 128, 8
        $region20: #{tpu_custom_call.1} parent=15 // pred_fallthru
          _
        // Predicated region
        $region21: #{tpu_custom_call.1} parent=15 // pred_check
          %p155 = pneg %p79
        $region22: #{tpu_custom_call.1} parent=15 // pred_check_branch
          %157 = sbr.rel (%p155) target = $region24
        $region23: #{tpu_custom_call.1} parent=15 // pred_region
          %s158 = sand.u32 %s69, 1
          %s159 = scalar_lea.sflag [#allocation6], %s158
          %s160 = sand.u32 %s69, 1
          %s161 = smul.addr %s160, 48
          %s162 = scalar_lea.vmem [#allocation5], %s161
          %s163 = smul.u32 2, %s25
          %s165 = ssub.s32 768, 768
          %166 = vsyncadd %s159, %s165
          %s167 = smul.addr %s24, 6
          %s168 = sadd.s32 %s163, %s167
          %s169 = smul.addr %s168, 128
          %s170 = scalar_lea.hbm %s1, %s169
          %s171 = sshll.u32 %s162, 4
          %s172 = int_to_ptr.vmem [resolvable:$true] %s171
          %177 = dma.hbm_to_vmem [thread:$0]  %s170, 768, %s172, %s159, 128, 128, 8
        $region24: #{tpu_custom_call.1} parent=15 // pred_fallthru
          _
      $region16: #{tpu_custom_call.1} parent=5 // pred_fallthru
        _
      %p178 = scmp.le.s32.totalorder 1, %s17
      %p179 = scmp.lt.s32.totalorder %s17, 3
      %p180 = pnand %p178, %p179
      %p181 = pneg %p180
      // Predicated region
      $region25: #{tpu_custom_call.1} parent=5 // pred_check
        _
      $region26: #{tpu_custom_call.1} parent=5 // pred_check_branch
        %183 = sbr.rel (%p180) target = $region28
      $region27: #{tpu_custom_call.1} parent=5 // pred_region
        %s184 = ssub.s32 %s17, 1
        %s185 = sand.u32 %s44, 1
        %s186 = scalar_lea.sflag [#allocation3], %s185
        %s187 = sand.u32 %s44, 1
        %s188 = smul.addr %s187, 48
        %s189 = scalar_lea.vmem [#allocation2], %s188
        // Predicated region
        $region29: #{tpu_custom_call.1} parent=27 // pred_check
          %p190 = pneg %p57
        $region30: #{tpu_custom_call.1} parent=27 // pred_check_branch
          %192 = sbr.rel (%p190) target = $region32
        $region31: #{tpu_custom_call.1} parent=27 // pred_region
          %193 = dma.done %s186, 768
        $region32: #{tpu_custom_call.1} parent=27 // pred_fallthru
          _
        %s194 = sand.u32 %s72, 1
        %s195 = scalar_lea.sflag [#allocation6], %s194
        %s196 = sand.u32 %s72, 1
        %s197 = smul.addr %s196, 48
        %s198 = scalar_lea.vmem [#allocation5], %s197
        // Predicated region
        $region33: #{tpu_custom_call.1} parent=27 // pred_check
          %p199 = pneg %p85
        $region34: #{tpu_custom_call.1} parent=27 // pred_check_branch
          %201 = sbr.rel (%p199) target = $region36
        $region35: #{tpu_custom_call.1} parent=27 // pred_region
          %202 = dma.done %s195, 768
        $region36: #{tpu_custom_call.1} parent=27 // pred_fallthru
          _
        %s203 = sand.u32 %s44, 1
        %s204 = scalar_lea.sflag [#allocation3], %s203
        %s205 = sand.u32 %s44, 1
        %s206 = smul.addr %s205, 48
        %s207 = scalar_lea.vmem [#allocation2], %s206
        %p208 = pneg %p57
        %p209 = pneg %p54
        %s210 = sand.u32 %s72, 1
        %s211 = scalar_lea.sflag [#allocation6], %s210
        %s212 = sand.u32 %s72, 1
        %s213 = smul.addr %s212, 48
        %s214 = scalar_lea.vmem [#allocation5], %s213
        %p215 = pneg %p85
        %p216 = pneg %p82
        %p217 = pneg %p113
        %p218 = pneg %p110
        %s219 = sand.u32 %s100, 1
        %s220 = scalar_lea.sflag [#allocation4], %s219
        %s221 = sand.u32 %s100, 1
        %s222 = scalar_lea.vmem [#allocation7], %s221
        %s223 = smul.u32 2, %s27
        %s224 = smul.u32 2, %s27
        %v225 = vld [vmem:[%s189] sm:$0xff]
        %v226 = vld [vmem:[%s189 + $0x8] sm:$0xff]
        %v227 = vld [vmem:[%s189 + $0x10] sm:$0xff]
        %v228 = vld [vmem:[%s189 + $0x18] sm:$0xff]
        %v229 = vld [vmem:[%s189 + $0x20] sm:$0xff]
        %v230 = vld [vmem:[%s189 + $0x28] sm:$0xff]
        %vm231 = vcmask 130048
        %v232 = vsel %vm231, %v225, 0.0
        %v233 = vsel %vm231, %v227, 0.0
        %v234 = vadd.f32 %v232, %v233
        %v235 = vsel %vm231, %v229, 0.0
        %v236 = vadd.f32 %v234, %v235
        %v237 = vsel %vm231, %v226, 0.0
        %v238 = vsel %vm231, %v228, 0.0
        %v239 = vadd.f32 %v237, %v238
        %v240 = vsel %vm231, %v230, 0.0
        %v241 = vadd.f32 %v239, %v240
        %v242 = vld [vmem:[%s198] sm:$0xff]
        %v243 = vld [vmem:[%s198 + $0x8] sm:$0xff]
        %v244 = vld [vmem:[%s198 + $0x10] sm:$0xff]
        %v245 = vld [vmem:[%s198 + $0x18] sm:$0xff]
        %v246 = vld [vmem:[%s198 + $0x20] sm:$0xff]
        %v247 = vld [vmem:[%s198 + $0x28] sm:$0xff]
        %v248 = vsel %vm231, %v242, 0.0
        %v249 = vsel %vm231, %v244, 0.0
        %v250 = vadd.f32 %v248, %v249
        %v251 = vsel %vm231, %v246, 0.0
        %v252 = vadd.f32 %v250, %v251
        %v253 = vsel %vm231, %v243, 0.0
        %v254 = vsel %vm231, %v245, 0.0
        %v255 = vadd.f32 %v253, %v254
        %v256 = vsel %vm231, %v247, 0.0
        %v257 = vadd.f32 %v255, %v256
        %vm258 = vcmask 1047680
        %259 = vrot.lane.b32.xlu0 %v236, 16
        %v260 = vpop.permute.xlu0 %259
        %v261 = vsel %vm258, %v260, %v236
        %262 = vrot.lane.b32.xlu0 %v241, 16
        %v263 = vpop.permute.xlu0 %262
        %v264 = vsel %vm258, %v263, %v241
        %265 = vrot.lane.b32.xlu0 %v261, 16
        %v266 = vpop.permute.xlu0 %265
        %267 = vrot.lane.b32.xlu0 %v264, 16
        %v268 = vpop.permute.xlu0 %267
        %v269 = vsel %vm258, %v266, %v236
        %v270 = vsel %vm258, %v268, %v241
        %271 = vrot.lane.b32.xlu0 %v252, 16
        %v272 = vpop.permute.xlu0 %271
        %v273 = vsel %vm258, %v272, %v252
        %274 = vrot.lane.b32.xlu0 %v257, 16
        %v275 = vpop.permute.xlu0 %274
        %v276 = vsel %vm258, %v275, %v257
        %277 = vrot.lane.b32.xlu0 %v273, 16
        %v278 = vpop.permute.xlu0 %277
        %279 = vrot.lane.b32.xlu0 %v276, 16
        %v280 = vpop.permute.xlu0 %279
        %v281 = vsel %vm258, %v278, %v252
        %v282 = vsel %vm258, %v280, %v257
        %v283 = vrot.slane %v236, 7
        %v284 = vrot.slane %v241, 7
        %v285 = vlaneseq
        %v286 = vshrl.u32 %v285, 7
        %vm287 = vcmp.lt.s32.totalorder %v286, 1
        %v288 = vsel %vm287, %v283, %v284
        %v289 = vsel %vm287, %v284, %v283
        %v290 = vrot.slane %v252, 7
        %v291 = vrot.slane %v257, 7
        %v292 = vsel %vm287, %v290, %v291
        %v293 = vsel %vm287, %v291, %v290
        %v294 = vlaneseq
        %v295 = vand.u32 %v294, 127
        %v296 = vadd.s32 %v286, 8
        %297 = vrot.lane.b32.xlu0 %v295, 16
        %v298 = vpop.permute.xlu0 %297
        %v299 = vsel %vm258, %v298, %v295
        %300 = vrot.lane.b32.xlu0 %v299, 16
        %v301 = vpop.permute.xlu0 %300
        %v302 = vsel %vm258, %v301, %v295
        %v303 = vrot.slane %v286, 7
        %v304 = vrot.slane %v296, 7
        %v305 = vsel %vm287, %v303, %v304
        %v306 = vsel %vm287, %v304, %v303
        %307 = vrot.lane.b32.xlu0 %v295, 15
        %v308 = vpop.permute.xlu0 %307
        %v309 = vsub.s32 %v302, %v308
        %vm310 = vcmp.lt.s32.totalorder %v309, 0
        %v311 = vsub.s32 0, %v309
        %v312 = vsel %vm310, %v311, %v309
        %vm313 = vcmp.eq.s32.totalorder %v312, 1
        %v314 = vsel %vm313, 1, 0
        %v315 = vcvt.s32.f32 %v314
        %v316 = vsub.s32 %v306, %v286
        %v317 = vsub.s32 %v305, %v296
        %vm318 = vcmp.lt.s32.totalorder %v316, 0
        %v319 = vsub.s32 0, %v316
        %v320 = vsel %vm318, %v319, %v316
        %vm321 = vcmp.lt.s32.totalorder %v317, 0
        %v322 = vsub.s32 0, %v317
        %v323 = vsel %vm321, %v322, %v317
        %vm324 = vcmp.eq.s32.totalorder %v320, 1
        %vm325 = vcmp.eq.s32.totalorder %v323, 1
        %v326 = vsel %vm324, 1, 0
        %v327 = vsel %vm325, 1, 0
        %v328 = vcvt.s32.f32 %v326
        %v329 = vcvt.s32.f32 %v327
        %s330 = smul.u32 %s27, 16
        %v331 = vstv %s330
        %v332 = vadd.s32 %v286, %v331
        %v333 = vadd.s32 %v296, %v331
        %vm334 = vcmp.eq.s32.totalorder %v295, 0
        %v335 = vsel %vm334, 1, 0
        %v336 = vcvt.s32.f32 %v335
        %vm337 = vcmp.eq.s32.totalorder %v295, 15
        %v338 = vsel %vm337, 1, 0
        %v339 = vcvt.s32.f32 %v338
        %v340 = vadd.f32 %v336, %v339
        %vm341 = vcmp.eq.s32.totalorder %v332, 0
        %vm342 = vcmp.eq.s32.totalorder %v333, 0
        %v343 = vsel %vm341, 1, 0
        %v344 = vsel %vm342, 1, 0
        %v345 = vcvt.s32.f32 %v343
        %v346 = vcvt.s32.f32 %v344
        %v347 = vadd.f32 %v340, %v345
        %v348 = vadd.f32 %v340, %v346
        %vm349 = vcmp.eq.s32.totalorder %v332, 15
        %vm350 = vcmp.eq.s32.totalorder %v333, 15
        %v351 = vsel %vm349, 1, 0
        %v352 = vsel %vm350, 1, 0
        %v353 = vcvt.s32.f32 %v351
        %v354 = vcvt.s32.f32 %v352
        %v355 = vadd.f32 %v347, %v353
        %v356 = vadd.f32 %v348, %v354
        %359 = vrot.lane.b32.xlu0 %v252, 15
        %v360 = vpop.permute.xlu0 %359
        %361 = vrot.lane.b32.xlu0 %v257, 15
        %v362 = vpop.permute.xlu0 %361
        %v365 = vsub.f32 %v281, %v360
        %v366 = vsub.f32 %v282, %v362
        %v367 = vand.u32 2147483647, %v365
        %v368 = vand.u32 2147483647, %v366
        %371 = vrot.lane.b32.xlu0 %v236, 15
        %v372 = vpop.permute.xlu0 %371
        %373 = vrot.lane.b32.xlu0 %v241, 15
        %v374 = vpop.permute.xlu0 %373
        %v377 = vsub.f32 %v269, %v372
        %v378 = vsub.f32 %v270, %v374
        %v379 = vand.u32 2147483647, %v377
        %v380 = vand.u32 2147483647, %v378
        %v381 = vsub.f32 %v367, %v379
        %v382 = vsub.f32 %v368, %v380
        %v383 = vmul.f32 %v381, %v381
        %v384 = vmul.f32 %v382, %v382
        %v385 = vsub.f32 %v293, %v252
        %v386 = vsub.f32 %v292, %v257
        %v387 = vand.u32 2147483647, %v385
        %v388 = vand.u32 2147483647, %v386
        %v389 = vsub.f32 %v289, %v236
        %v390 = vsub.f32 %v288, %v241
        %v391 = vand.u32 2147483647, %v389
        %v392 = vand.u32 2147483647, %v390
        %v393 = vsub.f32 %v387, %v391
        %v394 = vsub.f32 %v388, %v392
        %v395 = vmul.f32 %v393, %v393
        %v396 = vmul.f32 %v394, %v394
        %v397 = vand.u32 2147483647, %v252
        %v398 = vand.u32 2147483647, %v257
        %v399 = vand.u32 2147483647, %v236
        %v400 = vand.u32 2147483647, %v241
        %v401 = vsub.f32 %v397, %v399
        %v402 = vsub.f32 %v398, %v400
        %v403 = vmul.f32 %v401, %v401
        %v404 = vmul.f32 %v402, %v402
        %v405 = vmul.f32 %v383, %v315
        %v406 = vmul.f32 %v384, %v315
        %v407 = vmul.f32 %v395, %v328
        %v408 = vmul.f32 %v396, %v329
        %411 = vrot.lane.b32.xlu0 %v407, 15
        %v412 = vpop.permute.xlu0 %411
        %413 = vrot.lane.b32.xlu0 %v408, 15
        %v414 = vpop.permute.xlu0 %413
        %v417 = vadd.f32 %v405, %v412
        %v418 = vadd.f32 %v406, %v414
        %v419 = vmul.f32 %v403, %v355
        %v420 = vmul.f32 %v404, %v356
        %423 = vrot.lane.b32.xlu0 %v419, 15
        %v424 = vpop.permute.xlu0 %423
        %425 = vrot.lane.b32.xlu0 %v420, 15
        %v426 = vpop.permute.xlu0 %425
        %v429 = vadd.f32 %v417, %v424
        %v430 = vadd.f32 %v418, %v426
        %433 = vrot.lane.b32.xlu0 %v429, 113
        %v434 = vpop.permute.xlu0 %433
        %435 = vrot.lane.b32.xlu0 %v430, 113
        %v436 = vpop.permute.xlu0 %435
        %v439 = vsel %vm231, %v434, 0.0
        %v440 = vsel %vm231, %v436, 0.0
        %v441 = vadd.f32 %v439, %v440
        %442 = vadd.xlane.f32.xlu0 %v441
        %v443 = vpop.xlane.xlu0 %442
        %v444 = vrot.slane %v443, 4
        %v445 = vadd.f32 %v443, %v444
        %v446 = vrot.slane %v445, 2
        %v447 = vadd.f32 %v445, %v446
        %v448 = vrot.slane %v447, 1
        %v449 = vadd.f32 %v447, %v448
        %s450 = vtos %v449
        %v451 = vstv %s450
        %452 = vst [vmem:[%s222] sm:$0x1] %v451
        %s453 = sand.u32 %s100, 1
        %s454 = scalar_lea.sflag [#allocation4], %s453
        %s455 = sand.u32 %s100, 1
        %s456 = scalar_lea.vmem [#allocation7], %s455
        // Predicated region
        $region37: #{tpu_custom_call.1} parent=27 // pred_check
          %p457 = pneg %p110
        $region38: #{tpu_custom_call.1} parent=27 // pred_check_branch
          %459 = sbr.rel (%p457) target = $region40
        $region39: #{tpu_custom_call.1} parent=27 // pred_region
          %s461 = ssub.s32 16, 16
          %462 = vsyncadd %s454, %s461
          %s463 = sadd.s32 %s27, %s26
          %s464 = smul.addr %s463, 16
          %s465 = scalar_lea.hbm %s2, %s464
          %s467 = sshll.u32 %s456, 4
          %s468 = int_to_ptr.vmem [resolvable:$true] %s467
          %470 = dma.vmem_to_hbm [thread:$0]  %s468, 16, %s465, %s454
        $region40: #{tpu_custom_call.1} parent=27 // pred_fallthru
          _
      $region28: #{tpu_custom_call.1} parent=5 // pred_fallthru
        _
      %p471 = scmp.le.s32.totalorder 2, %s17
      // Predicated region
      $region41: #{tpu_custom_call.1} parent=5 // pred_check
        %p472 = pneg %p471
      $region42: #{tpu_custom_call.1} parent=5 // pred_check_branch
        %474 = sbr.rel (%p472) target = $region44
      $region43: #{tpu_custom_call.1} parent=5 // pred_region
        %s475 = ssub.s32 %s17, 2
        // Predicated region
        $region45: #{tpu_custom_call.1} parent=43 // pred_check
          %p476 = pneg %p116
        $region46: #{tpu_custom_call.1} parent=43 // pred_check_branch
          %478 = sbr.rel (%p476) target = $region48
        $region47: #{tpu_custom_call.1} parent=43 // pred_region
          %s479 = sand.u32 %s101, 1
          %s480 = scalar_lea.sflag [#allocation4], %s479
          %s481 = sand.u32 %s101, 1
          %s482 = scalar_lea.vmem [#allocation7], %s481
          %483 = dma.done %s480, 16
        $region48: #{tpu_custom_call.1} parent=43 // pred_fallthru
          _
      $region44: #{tpu_custom_call.1} parent=5 // pred_fallthru
        _
    $region6: #{tpu_custom_call.1} parent=1 // loop_footer
      %s21 = sadd.s32 1, %s17
    $region7: #{tpu_custom_call.1} parent=1 // loop_footer_branch
      %16 = sbr.rel target = $region3
    $region8: #{tpu_custom_call.1} parent=1 // loop_exit
      _
    %484 = vsyncpa [#allocation3], 1
    %s485 = scalar_lea.sflag [#allocation3], 1
    %486 = vsyncpa %s485, 1
    %487 = vsyncpa [#allocation6], 1
    %s488 = scalar_lea.sflag [#allocation6], 1
    %489 = vsyncpa %s488, 1
    %490 = vsyncpa [#allocation4], 1
    %s491 = scalar_lea.sflag [#allocation4], 1
    %492 = vsyncpa %s491, 1

</llo_original>
